<compile_context>
chip_gen: v7x
topology: tpu7x:2x2x1
jax: 0.10.0
libtpu: 0.0.40
codegen_flags: <defaults>
</compile_context>

<pallas_src>
import functools

import jax
import jax.numpy as jnp
from jax.experimental import pallas as pl
from jax.experimental.pallas import tpu as pltpu


def _se_kernel(x_ref, wr_ref, br_ref, we_ref, be_ref, o_ref, *, inv_hw):
    # x_ref / o_ref: (Nb, C, HW)  native dtype
    # wr_ref: (C, Cs) f32, br_ref: (1, Cs) f32
    # we_ref: (Cs, C) f32, be_ref: (1, C) f32
    x = x_ref[...]                                             # (Nb, C, HW)

    # Global average pool over the spatial (lane) axis, accumulated in f32.
    pooled = jnp.sum(x.astype(jnp.float32), axis=2) * inv_hw   # (Nb, C) f32

    # conv_reduce (1x1 conv on a 1x1 map == dense) + SiLU.  Tiny contraction
    # kept on the VPU (broadcast-multiply) + XLU (sublane sum); no MXU.
    h = jnp.sum(pooled[:, :, None] * wr_ref[...][None, :, :], axis=1) \
        + br_ref[...]                                          # (Nb, Cs) f32
    h = h * jax.nn.sigmoid(h)                                  # SiLU

    # conv_expand + Sigmoid -> per-(n, c) gate.
    g = jnp.sum(h[:, :, None] * we_ref[...][None, :, :], axis=1) \
        + be_ref[...]                                          # (Nb, C) f32
    gate = jax.nn.sigmoid(g).astype(x.dtype)                   # (Nb, C)

    # Broadcast-multiply in native dtype so the writeback stays input-width.
    o_ref[...] = x * gate[:, :, None]


def _pick_nb(n, per_elem_bytes, target_bytes):
    """Largest divisor of n giving ~target-size blocks; keep grid >= 2 if n >= 2."""
    cap = max(1, target_bytes // max(1, per_elem_bytes))
    if n >= 2:
        cap = min(cap, n // 2)        # keep >= 2 grid steps for v7x dual-TC
    nb = 1
    for d in range(1, n + 1):
        if n % d == 0 and d <= cap:
            nb = d
    return nb


def squeeze_excite(x_nchw, w_reduce, b_reduce, w_expand, b_expand,
                   *, block_target_bytes=4 << 20):
    """Fused SqueezeExcite forward.

    x_nchw:   (N, C, H, W) in its native dtype (f32 or bf16).
    w_reduce: (Cs, C)  (PyTorch conv weight (Cs, C, 1, 1) squeezed)
    b_reduce: (Cs,)
    w_expand: (C, Cs)
    b_expand: (C,)
    """
    N, C, H, W = x_nchw.shape
    Cs = w_reduce.shape[0]
    HW = H * W
    dtype = x_nchw.dtype
    dsize = jnp.dtype(dtype).itemsize

    # (N, C, H, W) -> (N, C, HW): contiguous merge of the minor dims, free.
    x = x_nchw.reshape(N, C, HW)

    # Tiny squeeze-path parameters in f32 (negligible HBM traffic).
    wr_t = jnp.asarray(w_reduce, jnp.float32).T            # (C, Cs)
    we_t = jnp.asarray(w_expand, jnp.float32).T            # (Cs, C)
    br = jnp.asarray(b_reduce, jnp.float32).reshape(1, Cs)
    be = jnp.asarray(b_expand, jnp.float32).reshape(1, C)

    # Block sizing: Nb batch elements per grid step.
    # TODO(synk): if a single (C, HW) slab ever exceeds VMEM, add a spatial
    # grid axis with a two-pass pool/scale scheme; not needed for SE shapes.
    per_elem_bytes = C * HW * dsize
    nb = _pick_nb(N, per_elem_bytes, block_target_bytes)
    grid = N // nb
    block_bytes = nb * per_elem_bytes

    # Explicit VMEM budget (double-buffered in + out blocks + slack), capped
    # so it is valid on v7x's 64 MiB VMEM as well as v5e/v6e's 128 MiB.
    vmem_limit = int(min(48 * 1024 * 1024, max(32 * 1024 * 1024, 6 * block_bytes)))

    kernel = functools.partial(_se_kernel, inv_hw=float(1.0 / HW))

    out = pl.pallas_call(
        kernel,
        out_shape=jax.ShapeDtypeStruct((N, C, HW), dtype),
        grid_spec=pltpu.PrefetchScalarGridSpec(
            num_scalar_prefetch=0,
            grid=(grid,),
            in_specs=[
                pl.BlockSpec((nb, C, HW), lambda n: (n, 0, 0)),
                pl.BlockSpec((C, Cs), lambda n: (0, 0)),
                pl.BlockSpec((1, Cs), lambda n: (0, 0)),
                pl.BlockSpec((Cs, C), lambda n: (0, 0)),
                pl.BlockSpec((1, C), lambda n: (0, 0)),
            ],
            out_specs=pl.BlockSpec((nb, C, HW), lambda n: (n, 0, 0)),
        ),
        compiler_params=pltpu.CompilerParams(
            dimension_semantics=("parallel",),
            vmem_limit_bytes=vmem_limit,
        ),
        cost_estimate=pl.CostEstimate(
            # Memory-bound: read x + write out dominates.
            flops=int(2 * N * C * HW + 4 * N * C * Cs),
            transcendentals=int(2 * N * (C + Cs)),
            bytes_accessed=int(2 * N * C * HW * dsize),
        ),
    )(x, wr_t, br, we_t, be)

    return out.reshape(N, C, H, W)


def _reference(x, w_reduce, b_reduce, w_expand, b_expand):
    # pure-JAX reference matching the PyTorch forward
    scale = jnp.mean(x, axis=(2, 3), keepdims=True)                 # (N, C, 1, 1)
    s = jnp.einsum("nchw,oc->nohw", scale, w_reduce) + b_reduce[None, :, None, None]
    s = s * jax.nn.sigmoid(s)                                       # SiLU
    s = jnp.einsum("nchw,oc->nohw", s, w_expand) + b_expand[None, :, None, None]
    s = jax.nn.sigmoid(s)
    return s * x


if __name__ == "__main__":
    # Module config: SqueezeExcite(input_c=16, expand_c=8) -> squeeze_c = 4
    input_c, expand_c = 16, 8
    squeeze_c = int(input_c * 0.25)
    N, H, W = 2, 16, 16

    key = jax.random.PRNGKey(0)
    kx, k1, k2, k3, k4 = jax.random.split(key, 5)

    x = jax.random.normal(kx, (N, expand_c, H, W), dtype=jnp.float32)
    # Deterministic synthetic parameters (conv 1x1 weights squeezed to 2D)
    w_reduce = 0.1 * jax.random.normal(k1, (squeeze_c, expand_c), dtype=jnp.float32)
    b_reduce = 0.1 * jax.random.normal(k2, (squeeze_c,), dtype=jnp.float32)
    w_expand = 0.1 * jax.random.normal(k3, (expand_c, squeeze_c), dtype=jnp.float32)
    b_expand = 0.1 * jax.random.normal(k4, (expand_c,), dtype=jnp.float32)

    out = squeeze_excite(x, w_reduce, b_reduce, w_expand, b_expand)
    out = jax.block_until_ready(out)

    ref = _reference(x, w_reduce, b_reduce, w_expand, b_expand)
    assert out.shape == (N, expand_c, H, W)
    assert out.dtype == x.dtype
    assert jnp.allclose(out, ref, atol=1e-5, rtol=1e-5), "mismatch vs reference"

    print("KERNEL_OK")
</pallas_src>

<mosaic_0001>
module attributes {stable_mosaic.version = 11 : i64} {
  func.func @_se_kernel(%arg0: i32, %arg1: memref<1x8x256xf32, #tpu.memory_space<vmem>>, %arg2: memref<8x4xf32, #tpu.memory_space<vmem>>, %arg3: memref<1x4xf32, #tpu.memory_space<vmem>>, %arg4: memref<4x8xf32, #tpu.memory_space<vmem>>, %arg5: memref<1x8xf32, #tpu.memory_space<vmem>>, %arg6: memref<1x8x256xf32, #tpu.memory_space<vmem>>) attributes {dimension_semantics = [#tpu.dimension_semantics<parallel>], iteration_bounds = array<i64: 2>, scalar_prefetch = 0 : i64, scratch_operands = 0 : i64, tpu.core_type = #tpu.core_type<tc>, window_params = [{transform_indices = @transform_0, window_bounds = array<i64: 1, 8, 256>}, {pipeline_mode = #tpu.pipeline_mode<synchronous>, transform_indices = @transform_1, window_bounds = array<i64: 8, 4>}, {pipeline_mode = #tpu.pipeline_mode<synchronous>, transform_indices = @transform_2, window_bounds = array<i64: 1, 4>}, {pipeline_mode = #tpu.pipeline_mode<synchronous>, transform_indices = @transform_3, window_bounds = array<i64: 4, 8>}, {pipeline_mode = #tpu.pipeline_mode<synchronous>, transform_indices = @transform_4, window_bounds = array<i64: 1, 8>}, {transform_indices = @transform_5, window_bounds = array<i64: 1, 8, 256>}]} {
    %c0 = arith.constant 0 : index
    %c0_0 = arith.constant 0 : index
    %c0_1 = arith.constant 0 : index
    %0 = vector.load %arg1[%c0, %c0_0, %c0_1] : memref<1x8x256xf32, #tpu.memory_space<vmem>>, vector<1x8x256xf32>
    %cst = arith.constant dense<0.000000e+00> : vector<1x8xf32>
    %1 = vector.multi_reduction <add>, %0, %cst [2] : vector<1x8x256xf32> to vector<1x8xf32>
    %cst_2 = arith.constant 3.906250e-03 : f32
    %2 = vector.broadcast %cst_2 : f32 to vector<1x8xf32>
    %3 = arith.mulf %1, %2 : vector<1x8xf32>
    %4 = vector.shape_cast %3 : vector<1x8xf32> to vector<1x8x1xf32>
    %c0_3 = arith.constant 0 : index
    %c0_4 = arith.constant 0 : index
    %5 = vector.load %arg2[%c0_3, %c0_4] : memref<8x4xf32, #tpu.memory_space<vmem>>, vector<8x4xf32>
    %6 = vector.shape_cast %5 : vector<8x4xf32> to vector<1x8x4xf32>
    %7 = vector.broadcast %4 : vector<1x8x1xf32> to vector<1x8x4xf32>
    %8 = arith.mulf %7, %6 : vector<1x8x4xf32>
    %cst_5 = arith.constant dense<0.000000e+00> : vector<1x4xf32>
    %9 = vector.multi_reduction <add>, %8, %cst_5 [1] : vector<1x8x4xf32> to vector<1x4xf32>
    %c0_6 = arith.constant 0 : index
    %c0_7 = arith.constant 0 : index
    %10 = vector.load %arg3[%c0_6, %c0_7] : memref<1x4xf32, #tpu.memory_space<vmem>>, vector<1x4xf32>
    %11 = arith.addf %9, %10 : vector<1x4xf32>
    %12 = arith.negf %11 : vector<1x4xf32>
    %13 = math.exp %12 : vector<1x4xf32>
    %cst_8 = arith.constant 1.000000e+00 : f32
    %14 = vector.broadcast %cst_8 : f32 to vector<1x4xf32>
    %15 = arith.addf %14, %13 : vector<1x4xf32>
    %16 = arith.divf %14, %15 : vector<1x4xf32>
    %17 = arith.mulf %11, %16 : vector<1x4xf32>
    %18 = vector.shape_cast %17 : vector<1x4xf32> to vector<1x4x1xf32>
    %c0_9 = arith.constant 0 : index
    %c0_10 = arith.constant 0 : index
    %19 = vector.load %arg4[%c0_9, %c0_10] : memref<4x8xf32, #tpu.memory_space<vmem>>, vector<4x8xf32>
    %20 = vector.shape_cast %19 : vector<4x8xf32> to vector<1x4x8xf32>
    %21 = vector.broadcast %18 : vector<1x4x1xf32> to vector<1x4x8xf32>
    %22 = arith.mulf %21, %20 : vector<1x4x8xf32>
    %cst_11 = arith.constant dense<0.000000e+00> : vector<1x8xf32>
    %23 = vector.multi_reduction <add>, %22, %cst_11 [1] : vector<1x4x8xf32> to vector<1x8xf32>
    %c0_12 = arith.constant 0 : index
    %c0_13 = arith.constant 0 : index
    %24 = vector.load %arg5[%c0_12, %c0_13] : memref<1x8xf32, #tpu.memory_space<vmem>>, vector<1x8xf32>
    %25 = arith.addf %23, %24 : vector<1x8xf32>
    %26 = arith.negf %25 : vector<1x8xf32>
    %27 = math.exp %26 : vector<1x8xf32>
    %cst_14 = arith.constant 1.000000e+00 : f32
    %28 = vector.broadcast %cst_14 : f32 to vector<1x8xf32>
    %29 = arith.addf %28, %27 : vector<1x8xf32>
    %30 = arith.divf %28, %29 : vector<1x8xf32>
    %31 = vector.shape_cast %30 : vector<1x8xf32> to vector<1x8x1xf32>
    %32 = vector.broadcast %31 : vector<1x8x1xf32> to vector<1x8x256xf32>
    %33 = arith.mulf %0, %32 : vector<1x8x256xf32>
    %c0_15 = arith.constant 0 : index
    %c0_16 = arith.constant 0 : index
    %c0_17 = arith.constant 0 : index
    %34 = vector.load %arg6[%c0_15, %c0_16, %c0_17] : memref<1x8x256xf32, #tpu.memory_space<vmem>>, vector<1x8x256xf32>
    tpu.vector_store %arg6[%c0_15, %c0_16, %c0_17], %33 {strides = array<i32>} : memref<1x8x256xf32, #tpu.memory_space<vmem>>, vector<1x8x256xf32>,
    return
  }
  func.func @transform_0(%arg0: i32) -> (i32, i32, i32) {
    %c0_i32 = arith.constant 0 : i32
    %c0_i32_0 = arith.constant 0 : i32
    %c0_i32_1 = arith.constant 0 : i32
    return %arg0, %c0_i32, %c0_i32_0 : i32, i32, i32
  }
  func.func @transform_1(%arg0: i32) -> (i32, i32) {
    %c0_i32 = arith.constant 0 : i32
    %c0_i32_0 = arith.constant 0 : i32
    %c0_i32_1 = arith.constant 0 : i32
    return %c0_i32, %c0_i32_0 : i32, i32
  }
  func.func @transform_2(%arg0: i32) -> (i32, i32) {
    %c0_i32 = arith.constant 0 : i32
    %c0_i32_0 = arith.constant 0 : i32
    %c0_i32_1 = arith.constant 0 : i32
    return %c0_i32, %c0_i32_0 : i32, i32
  }
  func.func @transform_3(%arg0: i32) -> (i32, i32) {
    %c0_i32 = arith.constant 0 : i32
    %c0_i32_0 = arith.constant 0 : i32
    %c0_i32_1 = arith.constant 0 : i32
    return %c0_i32, %c0_i32_0 : i32, i32
  }
  func.func @transform_4(%arg0: i32) -> (i32, i32) {
    %c0_i32 = arith.constant 0 : i32
    %c0_i32_0 = arith.constant 0 : i32
    %c0_i32_1 = arith.constant 0 : i32
    return %c0_i32, %c0_i32_0 : i32, i32
  }
  func.func @transform_5(%arg0: i32) -> (i32, i32, i32) {
    %c0_i32 = arith.constant 0 : i32
    %c0_i32_0 = arith.constant 0 : i32
    %c0_i32_1 = arith.constant 0 : i32
    return %arg0, %c0_i32, %c0_i32_0 : i32, i32, i32
  }
}

</mosaic_0001>

<llo_original>
// kernel: tpu_custom_call.1
$region0: #{tpu_custom_call.1}
  #allocation0 [shape = 'u32[]', space=smem, size = 0x4, offset = 0x4, fixed_abs, tag = 'smem constant byte address 0x4 - core index']
  #allocation1 [shape = 'u32[144,128]{1,0:T(1,128)}', space=vmem, size = 0x12000, scoped, tag = 'internal scratch']
  %s0 = inlined_call_operand.hbm [shape: f32[2,8,256], index: 0, kind: input, shape index: {}]
  %s1 = inlined_call_operand.vmem [shape: f32[8,4], index: 1, kind: input, shape index: {}]
  %s2 = inlined_call_operand.vmem [shape: f32[1,4], index: 2, kind: input, shape index: {}]
  %s3 = inlined_call_operand.vmem [shape: f32[4,8], index: 3, kind: input, shape index: {}]
  %s4 = inlined_call_operand.vmem [shape: f32[1,8], index: 4, kind: input, shape index: {}]
  %s5 = inlined_call_operand.hbm [shape: f32[2,8,256], index: 5, kind: output, shape index: {}]
  %s6 = sld [smem:[#allocation0]]
  $region57: #{tpu_custom_call.1} parent=0
    _
  %s8 = ssub.s32 1, %s6
  %s9 = scalar_select 0, %s8, %s6
  $region1: #{tpu_custom_call.1} parent=0
    #allocation2 [shape = 'u8[16384]{0}', space=vmem, size = 0x4000, scoped, tag = 'input window, operand 0']
    #allocation3 [shape = 's32[2]{0}', space=sflag, size = 0x8, scoped, tag = 'scoped memory for tpu_custom_call.1']
    #allocation4 [shape = 's32[2]{0}', space=sflag, size = 0x8, scoped, tag = 'scoped memory for tpu_custom_call.1']
    #allocation5 [shape = 'u8[16384]{0}', space=vmem, size = 0x4000, scoped, tag = 'output window, operand 0']
    %10 = vsyncpa [#allocation3], 0
    %s11 = scalar_lea.sflag [#allocation3], 1
    %12 = vsyncpa %s11, 0
    %13 = vsyncpa [#allocation4], 0
    %s14 = scalar_lea.sflag [#allocation4], 1
    %15 = vsyncpa %s14, 0
    loop: start=0, step=1, limit=4
    $region2: #{tpu_custom_call.1} parent=1 // loop_pre_header
      _
    $region3: #{tpu_custom_call.1} parent=1 // loop_header
      %s17 = sphi 0, %s21
      %p18 = scmp.ge.s32.totalorder %s17, 4
      %s27 = sphi 0, %s29
      %s30 = sphi 0, %s27
      %s31 = sphi 0, %s30
      %s47 = sphi 0, %s31
      %s51 = sphi 0, %s51
      %s53 = sphi 0, %s51
      %s54 = sphi 0, %s53
      %s68 = sphi 0, %s54
      %s72 = sphi 0, %s72
      %s74 = sphi 0, %s72
      %s75 = sphi 0, %s74
      %s89 = sphi 0, %s75
      %s93 = sphi 0, %s93
      %s95 = sphi 0, %s93
      %s96 = sphi 0, %s95
      %s110 = sphi 0, %s96
      %s114 = sphi 0, %s114
      %s116 = sphi 0, %s114
      %s117 = sphi 0, %s116
      %s131 = sphi 0, %s117
      %s137 = sphi 0, %s139
      %s140 = sphi 0, %s137
      %s141 = sphi 0, %s140
      %s157 = sphi 0, %s141
    $region4: #{tpu_custom_call.1} parent=1 // loop_header_branch
      %20 = sbr.rel (%p18) target = $region8
    $region5: #{tpu_custom_call.1} parent=1 // loop_body
      %s22 = ssub.s32 %s17, 1
      %s23 = ssub.s32 %s17, 2
      %s24 = sadd.s32 %s17, 1
      %s25 = ssub.s32 %s17, %s24
      %p26 = scmp.eq.s32.totalorder %s25, 0
      %s28 = sadd.s32 %s27, 1
      %s29 = scalar_select %p26, %s27, %s28
      %p32 = pneg %p26
      %p33 = scmp.eq.s32.totalorder %s17, 1
      %p34 = por %p32, %p33
      %p35 = scmp.ne.s32.totalorder %s27, %s30
      %p36 = scmp.eq.s32.totalorder %s17, 0
      %p37 = por %p35, %p36
      %p38 = scmp.ne.s32.totalorder %s27, %s30
      %p39 = scmp.eq.s32.totalorder %s22, 1
      %p40 = por %p38, %p39
      %p41 = scmp.ne.s32.totalorder %s30, %s31
      %p42 = scmp.eq.s32.totalorder %s22, 0
      %p43 = por %p41, %p42
      %p44 = scmp.ne.s32.totalorder %s30, %s31
      %p45 = scmp.eq.s32.totalorder %s23, 1
      %p46 = por %p44, %p45
      %p48 = scmp.ne.s32.totalorder %s31, %s47
      %p49 = scmp.eq.s32.totalorder %s23, 0
      %p50 = por %p48, %p49
      %s52 = sadd.s32 %s51, 1
      %p55 = scmp.eq.s32.totalorder %s17, 1
      %p56 = scmp.ne.s32.totalorder %s51, %s53
      %p57 = scmp.eq.s32.totalorder %s17, 0
      %p58 = por %p56, %p57
      %p59 = scmp.ne.s32.totalorder %s51, %s53
      %p60 = scmp.eq.s32.totalorder %s22, 1
      %p61 = por %p59, %p60
      %p62 = scmp.ne.s32.totalorder %s53, %s54
      %p63 = scmp.eq.s32.totalorder %s22, 0
      %p64 = por %p62, %p63
      %p65 = scmp.ne.s32.totalorder %s53, %s54
      %p66 = scmp.eq.s32.totalorder %s23, 1
      %p67 = por %p65, %p66
      %p69 = scmp.ne.s32.totalorder %s54, %s68
      %p70 = scmp.eq.s32.totalorder %s23, 0
      %p71 = por %p69, %p70
      %s73 = sadd.s32 %s72, 1
      %p76 = scmp.eq.s32.totalorder %s17, 1
      %p77 = scmp.ne.s32.totalorder %s72, %s74
      %p78 = scmp.eq.s32.totalorder %s17, 0
      %p79 = por %p77, %p78
      %p80 = scmp.ne.s32.totalorder %s72, %s74
      %p81 = scmp.eq.s32.totalorder %s22, 1
      %p82 = por %p80, %p81
      %p83 = scmp.ne.s32.totalorder %s74, %s75
      %p84 = scmp.eq.s32.totalorder %s22, 0
      %p85 = por %p83, %p84
      %p86 = scmp.ne.s32.totalorder %s74, %s75
      %p87 = scmp.eq.s32.totalorder %s23, 1
      %p88 = por %p86, %p87
      %p90 = scmp.ne.s32.totalorder %s75, %s89
      %p91 = scmp.eq.s32.totalorder %s23, 0
      %p92 = por %p90, %p91
      %s94 = sadd.s32 %s93, 1
      %p97 = scmp.eq.s32.totalorder %s17, 1
      %p98 = scmp.ne.s32.totalorder %s93, %s95
      %p99 = scmp.eq.s32.totalorder %s17, 0
      %p100 = por %p98, %p99
      %p101 = scmp.ne.s32.totalorder %s93, %s95
      %p102 = scmp.eq.s32.totalorder %s22, 1
      %p103 = por %p101, %p102
      %p104 = scmp.ne.s32.totalorder %s95, %s96
      %p105 = scmp.eq.s32.totalorder %s22, 0
      %p106 = por %p104, %p105
      %p107 = scmp.ne.s32.totalorder %s95, %s96
      %p108 = scmp.eq.s32.totalorder %s23, 1
      %p109 = por %p107, %p108
      %p111 = scmp.ne.s32.totalorder %s96, %s110
      %p112 = scmp.eq.s32.totalorder %s23, 0
      %p113 = por %p111, %p112
      %s115 = sadd.s32 %s114, 1
      %p118 = scmp.eq.s32.totalorder %s17, 1
      %p119 = scmp.ne.s32.totalorder %s114, %s116
      %p120 = scmp.eq.s32.totalorder %s17, 0
      %p121 = por %p119, %p120
      %p122 = scmp.ne.s32.totalorder %s114, %s116
      %p123 = scmp.eq.s32.totalorder %s22, 1
      %p124 = por %p122, %p123
      %p125 = scmp.ne.s32.totalorder %s116, %s117
      %p126 = scmp.eq.s32.totalorder %s22, 0
      %p127 = por %p125, %p126
      %p128 = scmp.ne.s32.totalorder %s116, %s117
      %p129 = scmp.eq.s32.totalorder %s23, 1
      %p130 = por %p128, %p129
      %p132 = scmp.ne.s32.totalorder %s117, %s131
      %p133 = scmp.eq.s32.totalorder %s23, 0
      %p134 = por %p132, %p133
      %s135 = ssub.s32 %s17, %s24
      %p136 = scmp.eq.s32.totalorder %s135, 0
      %s138 = sadd.s32 %s137, 1
      %s139 = scalar_select %p136, %s137, %s138
      %p142 = pneg %p136
      %p143 = scmp.eq.s32.totalorder %s17, 1
      %p144 = por %p142, %p143
      %p145 = scmp.ne.s32.totalorder %s137, %s140
      %p146 = scmp.eq.s32.totalorder %s17, 0
      %p147 = por %p145, %p146
      %p148 = scmp.ne.s32.totalorder %s137, %s140
      %p149 = scmp.eq.s32.totalorder %s22, 1
      %p150 = por %p148, %p149
      %p151 = scmp.ne.s32.totalorder %s140, %s141
      %p152 = scmp.eq.s32.totalorder %s22, 0
      %p153 = por %p151, %p152
      %p154 = scmp.ne.s32.totalorder %s140, %s141
      %p155 = scmp.eq.s32.totalorder %s23, 1
      %p156 = por %p154, %p155
      %p158 = scmp.ne.s32.totalorder %s141, %s157
      %p159 = scmp.eq.s32.totalorder %s23, 0
      %p160 = por %p158, %p159
      %p161 = scmp.le.s32.totalorder 1, %s17
      %p162 = scmp.lt.s32.totalorder %s17, 3
      %p163 = pnand %p161, %p162
      %p164 = pneg %p163
      // Predicated region
      $region9: #{tpu_custom_call.1} parent=5 // pred_check
        _
      $region10: #{tpu_custom_call.1} parent=5 // pred_check_branch
        %166 = sbr.rel (%p163) target = $region12
      $region11: #{tpu_custom_call.1} parent=5 // pred_region
        %s167 = ssub.s32 %s17, 1
        // Predicated region
        $region13: #{tpu_custom_call.1} parent=11 // pred_check
          %p168 = pneg %p64
        $region14: #{tpu_custom_call.1} parent=11 // pred_check_branch
          %170 = sbr.rel (%p168) target = $region16
        $region15: #{tpu_custom_call.1} parent=11 // pred_region
          _
        $region16: #{tpu_custom_call.1} parent=11 // pred_fallthru
          _
        // Predicated region
        $region17: #{tpu_custom_call.1} parent=11 // pred_check
          %p171 = pneg %p85
        $region18: #{tpu_custom_call.1} parent=11 // pred_check_branch
          %173 = sbr.rel (%p171) target = $region20
        $region19: #{tpu_custom_call.1} parent=11 // pred_region
          _
        $region20: #{tpu_custom_call.1} parent=11 // pred_fallthru
          _
        // Predicated region
        $region21: #{tpu_custom_call.1} parent=11 // pred_check
          %p174 = pneg %p106
        $region22: #{tpu_custom_call.1} parent=11 // pred_check_branch
          %176 = sbr.rel (%p174) target = $region24
        $region23: #{tpu_custom_call.1} parent=11 // pred_region
          _
        $region24: #{tpu_custom_call.1} parent=11 // pred_fallthru
          _
        // Predicated region
        $region25: #{tpu_custom_call.1} parent=11 // pred_check
          %p177 = pneg %p127
        $region26: #{tpu_custom_call.1} parent=11 // pred_check_branch
          %179 = sbr.rel (%p177) target = $region28
        $region27: #{tpu_custom_call.1} parent=11 // pred_region
          _
        $region28: #{tpu_custom_call.1} parent=11 // pred_fallthru
          _
      $region12: #{tpu_custom_call.1} parent=5 // pred_fallthru
        _
      %p180 = scmp.lt.s32.totalorder %s17, 2
      // Predicated region
      $region29: #{tpu_custom_call.1} parent=5 // pred_check
        %p181 = pneg %p180
      $region30: #{tpu_custom_call.1} parent=5 // pred_check_branch
        %183 = sbr.rel (%p181) target = $region32
      $region31: #{tpu_custom_call.1} parent=5 // pred_region
        // Predicated region
        $region33: #{tpu_custom_call.1} parent=31 // pred_check
          %p184 = pneg %p37
        $region34: #{tpu_custom_call.1} parent=31 // pred_check_branch
          %186 = sbr.rel (%p184) target = $region36
        $region35: #{tpu_custom_call.1} parent=31 // pred_region
          %s187 = sand.u32 %s27, 1
          %s188 = scalar_lea.sflag [#allocation3], %s187
          %s189 = sand.u32 %s27, 1
          %s190 = smul.addr %s189, 16
          %s191 = scalar_lea.vmem [#allocation2], %s190
          %s193 = ssub.s32 256, 256
          %194 = vsyncadd %s188, %s193
          %s195 = smul.addr %s17, 2
          %s196 = smul.addr %s195, 128
          %s197 = scalar_lea.hbm %s0, %s196
          %s199 = sshll.u32 %s191, 4
          %s200 = int_to_ptr.vmem [resolvable:$true] %s199
          %202 = dma.hbm_to_vmem [thread:$0]  %s197, 256, %s200, %s188
        $region36: #{tpu_custom_call.1} parent=31 // pred_fallthru
          _
      $region32: #{tpu_custom_call.1} parent=5 // pred_fallthru
        _
      %p203 = scmp.le.s32.totalorder 1, %s17
      %p204 = scmp.lt.s32.totalorder %s17, 3
      %p205 = pnand %p203, %p204
      %p206 = pneg %p205
      // Predicated region
      $region37: #{tpu_custom_call.1} parent=5 // pred_check
        _
      $region38: #{tpu_custom_call.1} parent=5 // pred_check_branch
        %208 = sbr.rel (%p205) target = $region40
      $region39: #{tpu_custom_call.1} parent=5 // pred_region
        %s209 = ssub.s32 %s17, 1
        %s210 = sand.u32 %s30, 1
        %s211 = scalar_lea.sflag [#allocation3], %s210
        %s212 = sand.u32 %s30, 1
        %s213 = smul.addr %s212, 16
        %s214 = scalar_lea.vmem [#allocation2], %s213
        // Predicated region
        $region41: #{tpu_custom_call.1} parent=39 // pred_check
          %p215 = pneg %p43
        $region42: #{tpu_custom_call.1} parent=39 // pred_check_branch
          %217 = sbr.rel (%p215) target = $region44
        $region43: #{tpu_custom_call.1} parent=39 // pred_region
          %218 = dma.done %s211, 256
        $region44: #{tpu_custom_call.1} parent=39 // pred_fallthru
          _
        %s219 = sand.u32 %s30, 1
        %s220 = scalar_lea.sflag [#allocation3], %s219
        %s221 = sand.u32 %s30, 1
        %s222 = smul.addr %s221, 16
        %s223 = scalar_lea.vmem [#allocation2], %s222
        %p224 = pneg %p43
        %p225 = pneg %p40
        %p226 = pneg %p64
        %p227 = pneg %p61
        %p228 = pneg %p85
        %p229 = pneg %p82
        %p230 = pneg %p106
        %p231 = pneg %p103
        %p232 = pneg %p127
        %p233 = pneg %p124
        %p234 = pneg %p153
        %p235 = pneg %p150
        %s236 = sand.u32 %s140, 1
        %s237 = scalar_lea.sflag [#allocation4], %s236
        %s238 = sand.u32 %s140, 1
        %s239 = smul.addr %s238, 16
        %s240 = scalar_lea.vmem [#allocation5], %s239
        %v241 = vld [vmem:[%s214] sm:$0xff]
        %v242 = vld [vmem:[%s214 + $0x8] sm:$0xff]
        %v243 = vadd.f32 %v241, %v242
        %244 = vadd.xlane.f32.xlu0 %v243
        %v245 = vpop.xlane.xlu0 %244
        %v246 = vmul.f32 %v245, 0.00390625
        %v247 = vld [vmem:[%s1] sm:$0xff]
        %v248 = vmul.f32 %v246, %v247
        %vm249 = vcmask 31744
        %v250 = vsel %vm249, %v248, 0.0
        %v251 = vrot.slane %v250, 4
        %v252 = vadd.f32 %v250, %v251
        %v253 = vrot.slane %v252, 2
        %v254 = vadd.f32 %v252, %v253
        %v255 = vrot.slane %v254, 1
        %v256 = vadd.f32 %v254, %v255
        %v257 = vld [vmem:[%s2] sm:$0x1]
        %v258 = vadd.f32 %v256, %v257
        %v259 = vxor.u32 %v258, 2147483648
        %v260 = vmul.f32 %v259, 1.442695
        %v261 = vpow.pop %v260
        %v262 = vadd.f32 %v261, 1.0
        %v263 = vrcp.pop %v262
        %v264 = vmul.f32 1.0, %v263
        %v265 = vmul.f32 %v258, %v264
        %v266 = vlaneseq
        %v267 = vshrl.u32 %v266, 7
        %v268 = vsub.s32 0, %v267
        %v269 = vrot.slane %v265, %v268
        %271 = vbcast.lane.b32.xlu0 %v269, 256
        %v272 = vpop.permute.xlu0 %271
        %v273 = vld [vmem:[%s3] sm:$0xf]
        %v274 = vmul.f32 %v272, %v273
        %vm275 = vcmask 60416
        %v276 = vsel %vm275, %v274, 0.0
        %v277 = vrot.slane %v276, 4
        %v278 = vadd.f32 %v276, %v277
        %v279 = vrot.slane %v278, 2
        %v280 = vadd.f32 %v278, %v279
        %v281 = vrot.slane %v280, 1
        %v282 = vadd.f32 %v280, %v281
        %v283 = vld [vmem:[%s4] sm:$0x1]
        %v284 = vadd.f32 %v282, %v283
        %v285 = vxor.u32 %v284, 2147483648
        %v286 = vmul.f32 %v285, 1.442695
        %v287 = vpow.pop %v286
        %v288 = vadd.f32 %v287, 1.0
        %v289 = vrcp.pop %v288
        %v290 = vmul.f32 1.0, %v289
        %v291 = vlaneseq
        %v292 = vshrl.u32 %v291, 7
        %v293 = vsub.s32 0, %v292
        %v294 = vrot.slane %v290, %v293
        %296 = vbcast.lane.b32.xlu0 %v294, 256
        %v297 = vpop.permute.xlu0 %296
        %v298 = vmul.f32 %v241, %v297
        %v299 = vmul.f32 %v242, %v297
        %300 = vst [vmem:[%s240] sm:$0xff] %v298
        %301 = vst [vmem:[%s240 + $0x8] sm:$0xff] %v299
        %s302 = sand.u32 %s140, 1
        %s303 = scalar_lea.sflag [#allocation4], %s302
        %s304 = sand.u32 %s140, 1
        %s305 = smul.addr %s304, 16
        %s306 = scalar_lea.vmem [#allocation5], %s305
        // Predicated region
        $region45: #{tpu_custom_call.1} parent=39 // pred_check
          %p307 = pneg %p150
        $region46: #{tpu_custom_call.1} parent=39 // pred_check_branch
          %309 = sbr.rel (%p307) target = $region48
        $region47: #{tpu_custom_call.1} parent=39 // pred_region
          %s311 = ssub.s32 256, 256
          %312 = vsyncadd %s303, %s311
          %s313 = smul.addr %s22, 2
          %s314 = smul.addr %s313, 128
          %s315 = scalar_lea.hbm %s5, %s314
          %s317 = sshll.u32 %s306, 4
          %s318 = int_to_ptr.vmem [resolvable:$true] %s317
          %320 = dma.vmem_to_hbm [thread:$0]  %s318, 256, %s315, %s303
        $region48: #{tpu_custom_call.1} parent=39 // pred_fallthru
          _
      $region40: #{tpu_custom_call.1} parent=5 // pred_fallthru
        _
      %p321 = scmp.le.s32.totalorder 2, %s17
      // Predicated region
      $region49: #{tpu_custom_call.1} parent=5 // pred_check
        %p322 = pneg %p321
      $region50: #{tpu_custom_call.1} parent=5 // pred_check_branch
        %324 = sbr.rel (%p322) target = $region52
      $region51: #{tpu_custom_call.1} parent=5 // pred_region
        %s325 = ssub.s32 %s17, 2
        // Predicated region
        $region53: #{tpu_custom_call.1} parent=51 // pred_check
          %p326 = pneg %p156
        $region54: #{tpu_custom_call.1} parent=51 // pred_check_branch
          %328 = sbr.rel (%p326) target = $region56
        $region55: #{tpu_custom_call.1} parent=51 // pred_region
          %s329 = sand.u32 %s141, 1
          %s330 = scalar_lea.sflag [#allocation4], %s329
          %s331 = sand.u32 %s141, 1
          %s332 = smul.addr %s331, 16
          %s333 = scalar_lea.vmem [#allocation5], %s332
          %334 = dma.done %s330, 256
        $region56: #{tpu_custom_call.1} parent=51 // pred_fallthru
          _
      $region52: #{tpu_custom_call.1} parent=5 // pred_fallthru
        _
    $region6: #{tpu_custom_call.1} parent=1 // loop_footer
      %s21 = sadd.s32 1, %s17
    $region7: #{tpu_custom_call.1} parent=1 // loop_footer_branch
      %16 = sbr.rel target = $region3
    $region8: #{tpu_custom_call.1} parent=1 // loop_exit
      _
    %335 = vsyncpa [#allocation3], 1
    %s336 = scalar_lea.sflag [#allocation3], 1
    %337 = vsyncpa %s336, 1
    %338 = vsyncpa [#allocation4], 1
    %s339 = scalar_lea.sflag [#allocation4], 1
    %340 = vsyncpa %s339, 1

</llo_original>
